<compile_context>
chip_gen: v5e
topology: v5e:2x2
jax: 0.10.0
libtpu: 0.0.40
codegen_flags: <defaults>
</compile_context>

<pallas_src>
import functools

import jax
import jax.numpy as jnp
from jax.experimental import pallas as pl
from jax.experimental.pallas import tpu as pltpu

ALPHA = 2.0
GAMMA = 2.0


def _round_up(x, m):
    return ((x + m - 1) // m) * m


def _focal_loss_kernel(logits_ref, targets_ref, out_ref, acc_ref,
                       *, n_total, tn, alpha, gamma):
    i = pl.program_id(0)

    @pl.when(i == 0)
    def _init():
        acc_ref[0, 0] = jnp.float32(0.0)

    x = logits_ref[...].astype(jnp.float32)        # (tn, C)
    t = targets_ref[...]                           # (tn, 1) int32

    # Numerically-stable softmax pieces (shared between CE and pt).
    m = jnp.max(x, axis=-1, keepdims=True)         # (tn, 1)
    z = x - m                                      # (tn, C)
    ez = jnp.exp(z)                                # (tn, C)  -- only exp in the kernel
    denom = jnp.sum(ez, axis=-1, keepdims=True)    # (tn, 1)

    # Gather z[i, t[i]] and exp(z)[i, t[i]] with one one-hot mask (no dynamic gather).
    col = jax.lax.broadcasted_iota(jnp.int32, x.shape, 1)
    onehot = col == t
    z_t = jnp.sum(jnp.where(onehot, z, 0.0), axis=-1, keepdims=True)    # (tn, 1)
    ez_t = jnp.sum(jnp.where(onehot, ez, 0.0), axis=-1, keepdims=True)  # (tn, 1)

    # ce = logsumexp - x_t = log(denom) - z_t ;  pt = exp(-ce) = exp(z_t)/denom
    ce = jnp.maximum(jnp.log(denom) - z_t, 0.0)                          # (tn, 1)
    pt = ez_t * pl.reciprocal(denom, approx=True)                        # (tn, 1)

    q = 1.0 - pt
    if gamma == 2:                      # static: avoid float pow (EUP exp/log chain)
        w = q * q
    else:
        w = jnp.maximum(q, 0.0) ** gamma
    f = alpha * w * ce                                                   # (tn, 1)

    # Mask rows past the real N (only present if N was padded up to the tile).
    if n_total % tn != 0:
        row = jax.lax.broadcasted_iota(jnp.int32, f.shape, 0) + i * tn
        f = jnp.where(row < n_total, f, 0.0)

    acc_ref[0, 0] += jnp.sum(f)

    @pl.when(i == pl.num_programs(0) - 1)
    def _finalize():
        out_ref[0, 0] = acc_ref[0, 0] * jnp.float32(1.0 / n_total)


def focal_loss(inputs, targets, *, alpha=ALPHA, gamma=GAMMA, block_rows=1024):
    """inputs: (N, C) float logits; targets: (N,) int class indices -> scalar f32.

    block_rows: row-tile size.  1024 rows x full C keeps the kernel HBM-bound and
    amortizes per-step overhead on v5e/v6e; halve it on v7x (64 MiB VMEM) if C is
    large.  For tiny N (like the unit test below) a pure-JAX path would be as
    fast, but the kernel handles it correctly via a single grid step.
    """
    n, c = inputs.shape

    tn = min(block_rows, _round_up(n, 8))
    tn = _round_up(tn, 8)                 # second-to-last block dim must be %8
    n_pad = _round_up(n, tn)
    num_blocks = n_pad // tn

    x = inputs.astype(jnp.float32)
    t = targets.astype(jnp.int32).reshape(n, 1)
    if n_pad != n:
        x = jnp.pad(x, ((0, n_pad - n), (0, 0)))
        t = jnp.pad(t, ((0, n_pad - n), (0, 0)))

    # Double-buffered logits + targets tiles, plus headroom; capped at 64 MiB so
    # the same setting is valid on v7x (64 MiB physical VMEM) and v5e/v6e.
    tile_bytes = tn * c * 4 + tn * 4
    vmem_limit = int(min(64 * 1024 * 1024,
                         max(16 * 1024 * 1024, 4 * tile_bytes + (1 << 20))))

    kernel = functools.partial(_focal_loss_kernel,
                               n_total=n, tn=tn, alpha=alpha, gamma=gamma)

    out = pl.pallas_call(
        kernel,
        out_shape=jax.ShapeDtypeStruct((1, 1), jnp.float32),
        grid_spec=pltpu.PrefetchScalarGridSpec(
            num_scalar_prefetch=0,
            grid=(num_blocks,),
            in_specs=[
                pl.BlockSpec((tn, c), lambda i: (i, 0)),
                pl.BlockSpec((tn, 1), lambda i: (i, 0)),
            ],
            out_specs=pl.BlockSpec(memory_space=pltpu.MemorySpace.SMEM),
            scratch_shapes=[pltpu.SMEM((1, 1), jnp.float32)],
        ),
        compiler_params=pltpu.CompilerParams(
            dimension_semantics=("arbitrary",),   # running-sum accumulator axis
            vmem_limit_bytes=vmem_limit,
        ),
    )(x, t)
    return out[0, 0]


def focal_loss_ref(inputs, targets, *, alpha=ALPHA, gamma=GAMMA):
    # Pure-JAX reference for sanity check.
    logp = jax.nn.log_softmax(inputs.astype(jnp.float32), axis=-1)
    ce = -jnp.take_along_axis(logp, targets.reshape(-1, 1), axis=-1)[:, 0]
    pt = jnp.exp(-ce)
    return jnp.mean(alpha * (1.0 - pt) ** gamma * ce)


if __name__ == "__main__":
    key = jax.random.PRNGKey(0)
    k1, k2 = jax.random.split(key)
    N, C = 8, 32
    inputs = jax.random.normal(k1, (N, C), dtype=jnp.float32)
    targets = jax.random.randint(k2, (N,), 0, C, dtype=jnp.int32)

    out = focal_loss(inputs, targets)
    jax.block_until_ready(out)

    ref = focal_loss_ref(inputs, targets)
    # Tolerance accounts for pl.reciprocal(approx=True) in the pt computation.
    assert jnp.allclose(out, ref, rtol=2e-3, atol=2e-3), (out, ref)
    print("KERNEL_OK")
</pallas_src>

<mosaic_0001>
module attributes {stable_mosaic.version = 11 : i64} {
  func.func @_focal_loss_kernel(%arg0: i32, %arg1: memref<8x32xf32, #tpu.memory_space<vmem>>, %arg2: memref<8x1xi32, #tpu.memory_space<vmem>>, %arg3: memref<1x1xf32, #tpu.memory_space<smem>>, %arg4: memref<1x1xf32, #tpu.memory_space<smem>>) attributes {dimension_semantics = [#tpu.dimension_semantics<arbitrary>], iteration_bounds = array<i64: 1>, scalar_prefetch = 0 : i64, scratch_operands = 1 : i64, tpu.core_type = #tpu.core_type<tc>, window_params = [{transform_indices = @transform_0, window_bounds = array<i64: 8, 32>}, {transform_indices = @transform_1, window_bounds = array<i64: 8, 1>}, {transform_indices = @transform_2, window_bounds = array<i64: 1, 1>}]} {
    %c0_i32 = arith.constant 0 : i32
    %0 = arith.cmpi eq, %arg0, %c0_i32 : i32
    %1 = arith.extui %0 : i1 to i32
    %c0_i32_0 = arith.constant 0 : i32
    %2 = arith.cmpi ne, %1, %c0_i32_0 : i32
    scf.if %2 {
      %cst_19 = arith.constant 0.000000e+00 : f32
      %c0_20 = arith.constant 0 : index
      %c0_21 = arith.constant 0 : index
      %45 = memref.load %arg4[%c0_20, %c0_21] : memref<1x1xf32, #tpu.memory_space<smem>>
      memref.store %cst_19, %arg4[%c0_20, %c0_21] : memref<1x1xf32, #tpu.memory_space<smem>>
    } else {
    }
    %c0 = arith.constant 0 : index
    %c0_1 = arith.constant 0 : index
    %3 = vector.load %arg1[%c0, %c0_1] : memref<8x32xf32, #tpu.memory_space<vmem>>, vector<8x32xf32>
    %c0_2 = arith.constant 0 : index
    %c0_3 = arith.constant 0 : index
    %4 = vector.load %arg2[%c0_2, %c0_3] : memref<8x1xi32, #tpu.memory_space<vmem>>, vector<8x1xi32>
    %cst = arith.constant dense<0xFF800000> : vector<8xf32>
    %5 = vector.multi_reduction <maximumf>, %3, %cst [1] : vector<8x32xf32> to vector<8xf32>
    %6 = vector.shape_cast %5 : vector<8xf32> to vector<8x1xf32>
    %7 = vector.broadcast %6 : vector<8x1xf32> to vector<8x32xf32>
    %8 = arith.subf %3, %7 : vector<8x32xf32>
    %9 = math.exp %8 : vector<8x32xf32>
    %cst_4 = arith.constant dense<0.000000e+00> : vector<8xf32>
    %10 = vector.multi_reduction <add>, %9, %cst_4 [1] : vector<8x32xf32> to vector<8xf32>
    %11 = vector.shape_cast %10 : vector<8xf32> to vector<8x1xf32>
    %12 = tpu.iota {dimensions = array<i32: 1>} : vector<8x32xi32>
    %13 = vector.broadcast %4 : vector<8x1xi32> to vector<8x32xi32>
    %14 = arith.cmpi eq, %12, %13 : vector<8x32xi32>
    %cst_5 = arith.constant 0.000000e+00 : f32
    %15 = vector.broadcast %cst_5 : f32 to vector<8x32xf32>
    %16 = arith.select %14, %8, %15 : vector<8x32xi1>, vector<8x32xf32>
    %cst_6 = arith.constant dense<0.000000e+00> : vector<8xf32>
    %17 = vector.multi_reduction <add>, %16, %cst_6 [1] : vector<8x32xf32> to vector<8xf32>
    %18 = vector.shape_cast %17 : vector<8xf32> to vector<8x1xf32>
    %cst_7 = arith.constant 0.000000e+00 : f32
    %19 = vector.broadcast %cst_7 : f32 to vector<8x32xf32>
    %20 = arith.select %14, %9, %19 : vector<8x32xi1>, vector<8x32xf32>
    %cst_8 = arith.constant dense<0.000000e+00> : vector<8xf32>
    %21 = vector.multi_reduction <add>, %20, %cst_8 [1] : vector<8x32xf32> to vector<8xf32>
    %22 = vector.shape_cast %21 : vector<8xf32> to vector<8x1xf32>
    %23 = math.log %11 : vector<8x1xf32>
    %24 = arith.subf %23, %18 : vector<8x1xf32>
    %cst_9 = arith.constant 0.000000e+00 : f32
    %25 = vector.broadcast %cst_9 : f32 to vector<8x1xf32>
    %26 = arith.maximumf %24, %25 : vector<8x1xf32>
    %27 = tpu.reciprocal %11 {approx = true} : vector<8x1xf32> -> vector<8x1xf32>
    %28 = arith.mulf %22, %27 : vector<8x1xf32>
    %cst_10 = arith.constant 1.000000e+00 : f32
    %29 = vector.broadcast %cst_10 : f32 to vector<8x1xf32>
    %30 = arith.subf %29, %28 : vector<8x1xf32>
    %31 = arith.mulf %30, %30 : vector<8x1xf32>
    %cst_11 = arith.constant 2.000000e+00 : f32
    %32 = vector.broadcast %cst_11 : f32 to vector<8x1xf32>
    %33 = arith.mulf %32, %31 : vector<8x1xf32>
    %34 = arith.mulf %33, %26 : vector<8x1xf32>
    %c0_12 = arith.constant 0 : index
    %c0_13 = arith.constant 0 : index
    %35 = memref.load %arg4[%c0_12, %c0_13] : memref<1x1xf32, #tpu.memory_space<smem>>
    %36 = vector.shape_cast %34 : vector<8x1xf32> to vector<1x8x1xf32>
    %cst_14 = arith.constant dense<0.000000e+00> : vector<1xf32>
    %37 = vector.multi_reduction <add>, %36, %cst_14 [1, 2] : vector<1x8x1xf32> to vector<1xf32>
    %38 = vector.shape_cast %37 : vector<1xf32> to vector<1x1x1xf32>
    %39 = vector.extract %38[0, 0, 0] : f32 from vector<1x1x1xf32>
    %40 = arith.addf %35, %39 : f32
    %c0_15 = arith.constant 0 : index
    %c0_16 = arith.constant 0 : index
    %41 = memref.load %arg4[%c0_15, %c0_16] : memref<1x1xf32, #tpu.memory_space<smem>>
    memref.store %40, %arg4[%c0_15, %c0_16] : memref<1x1xf32, #tpu.memory_space<smem>>
    %c0_i32_17 = arith.constant 0 : i32
    %42 = arith.cmpi eq, %arg0, %c0_i32_17 : i32
    %43 = arith.extui %42 : i1 to i32
    %c0_i32_18 = arith.constant 0 : i32
    %44 = arith.cmpi ne, %43, %c0_i32_18 : i32
    scf.if %44 {
      %c0_19 = arith.constant 0 : index
      %c0_20 = arith.constant 0 : index
      %45 = memref.load %arg4[%c0_19, %c0_20] : memref<1x1xf32, #tpu.memory_space<smem>>
      %cst_21 = arith.constant 1.250000e-01 : f32
      %46 = arith.mulf %45, %cst_21 : f32
      %c0_22 = arith.constant 0 : index
      %c0_23 = arith.constant 0 : index
      %47 = memref.load %arg3[%c0_22, %c0_23] : memref<1x1xf32, #tpu.memory_space<smem>>
      memref.store %46, %arg3[%c0_22, %c0_23] : memref<1x1xf32, #tpu.memory_space<smem>>
    } else {
    }
    return
  }
  func.func @transform_0(%arg0: i32) -> (i32, i32) {
    %c0_i32 = arith.constant 0 : i32
    %c0_i32_0 = arith.constant 0 : i32
    return %arg0, %c0_i32 : i32, i32
  }
  func.func @transform_1(%arg0: i32) -> (i32, i32) {
    %c0_i32 = arith.constant 0 : i32
    %c0_i32_0 = arith.constant 0 : i32
    return %arg0, %c0_i32 : i32, i32
  }
  func.func @transform_2(%arg0: i32) -> (i32, i32) {
    %c0_i32 = arith.constant 0 : i32
    %c0_i32_0 = arith.constant 0 : i32
    %c0_i32_1 = arith.constant 0 : i32
    return %c0_i32, %c0_i32_0 : i32, i32
  }
}

</mosaic_0001>

<llo_original>
// kernel: tpu_custom_call.1
$region0: #{tpu_custom_call.1}
  #allocation0 [shape = 'u32[]', space=smem, size = 0x4, offset = 0x4, fixed_abs, tag = 'smem constant byte address 0x4 - core index']
  #allocation1 [shape = 'u32[72,128]{1,0:T(1,128)}', space=vmem, size = 0x9000, scoped, tag = 'internal scratch']
  #allocation2 [shape = 'f32[1,1]{1,0:T(1,128)}', space=smem, size = 0x200, scoped, tag = 'scratch operand']
  %s0 = inlined_call_operand.vmem [shape: f32[8,32], index: 0, kind: input, shape index: {}]
  %s1 = inlined_call_operand.vmem [shape: s32[8,1], index: 1, kind: input, shape index: {}]
  %s2 = inlined_call_operand.hbm [shape: f32[1,1], index: 2, kind: output, shape index: {}]
  %s3 = sld [smem:[#allocation0]]
  $region26: #{tpu_custom_call.1} parent=0
    _
  %s5 = ssub.s32 1, %s3
  %s6 = scalar_select 0, %s5, %s3
  $region1: #{tpu_custom_call.1} parent=0
    #allocation3 [shape = 'u8[512]{0}', space=smem, size = 0x200, scoped, tag = 'output window, operand 0, single buffered']
    #allocation4 [shape = 's32[1]{0}', space=sflag, size = 0x4, scoped, tag = 'scoped memory for tpu_custom_call.1']
    %7 = vsyncpa [#allocation4], 0
    // Predicated region
    $region2: #{tpu_custom_call.1} parent=1 // pred_check
      _
    $region3: #{tpu_custom_call.1} parent=1 // pred_check_branch
      %9 = sbr.rel (0) target = $region5
    $region4: #{tpu_custom_call.1} parent=1 // pred_region
      _
    $region5: #{tpu_custom_call.1} parent=1 // pred_fallthru
      _
    // Predicated region
    $region6: #{tpu_custom_call.1} parent=1 // pred_check
      _
    $region7: #{tpu_custom_call.1} parent=1 // pred_check_branch
      %11 = sbr.rel (0) target = $region9
    $region8: #{tpu_custom_call.1} parent=1 // pred_region
      _
    $region9: #{tpu_custom_call.1} parent=1 // pred_fallthru
      _
    %p12 = scmp.eq.s32.totalorder 0, 0
    // Predicated region
    $region10: #{tpu_custom_call.1} parent=1 // pred_check
      %p13 = pneg %p12
    $region11: #{tpu_custom_call.1} parent=1 // pred_check_branch
      %15 = sbr.rel (%p13) target = $region13
    $region12: #{tpu_custom_call.1} parent=1 // pred_region
      %s16 = scalar_lea.smem [#allocation2], 0
      %17 = sst [smem:[%s16]] 0.0
    $region13: #{tpu_custom_call.1} parent=1 // pred_fallthru
      _
    %v18 = vld [vmem:[%s0] sm:$0xff]
    %v19 = vld [vmem:[%s1] sm:$0xff]
    %vm20 = vcmask 261120
    %v21 = vsel %vm20, %v18, -inf
    %22 = vmax.xlane.f32.xlu0 %v21
    %v23 = vpop.xlane.xlu0 %22
    %v24 = vsub.f32 %v18, %v23
    %v25 = vmul.f32 %v24, 1.442695
    %v26 = vpow.pop %v25
    %v27 = vsel %vm20, %v26, 0.0
    %28 = vadd.xlane.f32.xlu0 %v27
    %v29 = vpop.xlane.xlu0 %28
    %v30 = vlaneseq
    %v31 = vand.u32 %v30, 127
    %32 = vset.pattern.permute.xlu0 0
    %33 = vperm.xlu0 %32, %v19
    %v34 = vpop.permute.xlu0 %33
    %vm35 = vcmp.eq.s32.totalorder %v31, %v34
    %v36 = vsel %vm35, %v24, 0.0
    %v37 = vsel %vm20, %v36, 0.0
    %38 = vadd.xlane.f32.xlu0 %v37
    %v39 = vpop.xlane.xlu0 %38
    %v40 = vsel %vm35, %v26, 0.0
    %v41 = vsel %vm20, %v40, 0.0
    %42 = vadd.xlane.f32.xlu0 %v41
    %v43 = vpop.xlane.xlu0 %42
    %v44 = vlog2.pop %v29
    %v45 = vmul.f32 %v44, 0.6931472
    %v46 = vsub.f32 %v45, %v39
    %v47 = vmax.f32 %v46, 0.0
    %v48 = vrcp.pop %v29
    %v49 = vmul.f32 %v43, %v48
    %v50 = vsub.f32 1.0, %v49
    %v51 = vmul.f32 %v50, %v50
    %v52 = vmul.f32 %v51, 2.0
    %v53 = vmul.f32 %v52, %v47
    %s54 = sld [smem:[#allocation2]]
    %vm55 = vcmask 7168
    %v56 = vsel %vm55, %v53, 0.0
    %57 = vadd.xlane.f32.xlu0 %v56
    %v58 = vpop.xlane.xlu0 %57
    %v59 = vrot.slane %v58, 4
    %v60 = vadd.f32 %v58, %v59
    %v61 = vrot.slane %v60, 2
    %v62 = vadd.f32 %v60, %v61
    %v63 = vrot.slane %v62, 1
    %v64 = vadd.f32 %v62, %v63
    %s65 = vtos %v64
    %s66 = sadd.f32 %s54, %s65
    %s67 = scalar_lea.smem [#allocation2], 0
    %68 = sst [smem:[%s67]] %s66
    // Predicated region
    $region14: #{tpu_custom_call.1} parent=1 // pred_check
      %p69 = pneg %p12
    $region15: #{tpu_custom_call.1} parent=1 // pred_check_branch
      %71 = sbr.rel (%p69) target = $region17
    $region16: #{tpu_custom_call.1} parent=1 // pred_region
      %s72 = sld [smem:[#allocation2]]
      %s73 = smul.f32 %s72, 0.125
      %s74 = scalar_lea.smem [#allocation3], 0
      %75 = sst [smem:[%s74]] %s73
    $region17: #{tpu_custom_call.1} parent=1 // pred_fallthru
      _
    // Predicated region
    $region18: #{tpu_custom_call.1} parent=1 // pred_check
      _
    $region19: #{tpu_custom_call.1} parent=1 // pred_check_branch
      %77 = sbr.rel (0) target = $region21
    $region20: #{tpu_custom_call.1} parent=1 // pred_region
      %79 = vsyncadd [#allocation4], 0
      %s81 = sshll.u32 %s2, 4
      %s82 = int_to_ptr.hbm [resolvable:$true] %s81
      %84 = dma.smem_to_hbm [#allocation3], 16, %s82, [#allocation4]
    $region21: #{tpu_custom_call.1} parent=1 // pred_fallthru
      _
    // Predicated region
    $region22: #{tpu_custom_call.1} parent=1 // pred_check
      _
    $region23: #{tpu_custom_call.1} parent=1 // pred_check_branch
      %86 = sbr.rel (0) target = $region25
    $region24: #{tpu_custom_call.1} parent=1 // pred_region
      %88 = dma.done [#allocation4], 16
    $region25: #{tpu_custom_call.1} parent=1 // pred_fallthru
      _
    %89 = sfence
    %90 = vsyncpa [#allocation4], 1

</llo_original>
